<compile_context>
chip_gen: v5e
topology: v5e:2x2
jax: 0.10.0
libtpu: 0.0.40
codegen_flags: <defaults>
</compile_context>

<pallas_src>
import functools

import jax
import jax.numpy as jnp
from jax.experimental import pallas as pl
from jax.experimental.pallas import tpu as pltpu


_LANE = 128
_MAX_TD = 512                          # lane-dense column-tile width target
_TWO_PASS_BLOCK_BYTES = 2 * 1024 * 1024  # per-step DMA sweet spot for fallback


def _vmem_capacity_bytes() -> int:
    """Physical VMEM per TensorCore; conservative 64 MiB fallback (v7x-sized)."""
    try:
        return int(pltpu.get_tpu_info().vmem_capacity_bytes)
    except Exception:  # pragma: no cover - e.g. interpret mode / old runtime
        return 64 * 1024 * 1024


_VMEM_PHYS = _vmem_capacity_bytes()
# v5e/v6e (128 MiB) -> 96 MiB limit; v7x (64 MiB) -> 48 MiB limit.
_VMEM_LIMIT_BYTES = min(100 * 1024 * 1024, (_VMEM_PHYS * 3) // 4)
_USABLE_VMEM = _VMEM_LIMIT_BYTES - 4 * 1024 * 1024  # headroom for Mosaic scratch


def _round_up(v: int, m: int) -> int:
    return (v + m - 1) // m * m


def _largest_dividing_tile(d_pad: int, td: int) -> int:
    """Largest multiple of 128 that is <= td and divides d_pad (d_pad % 128 == 0)."""
    t = (td // _LANE) * _LANE
    while t > _LANE and d_pad % t != 0:
        t -= _LANE
    return t


# ----------------------------------------------------------------------------
# Single-pass path: whole node axis resident per column tile.
# ----------------------------------------------------------------------------
def _pairnorm_resident_kernel(x_ref, o_ref, *, scale: float, eps: float, inv_n: float):
    x = x_ref[...].astype(jnp.float32)                       # [N, TD]
    mean = jnp.sum(x, axis=0, keepdims=True) * inv_n         # [1, TD]
    xc = x - mean                                            # live only up to the reduction
    var = jnp.sum(xc * xc, axis=0, keepdims=True) * inv_n    # [1, TD]
    inv = scale * jax.lax.rsqrt(var + eps)                   # scale folded into rsqrt (EUP)
    # Recompute the centered value as x*inv - mean*inv so no full-slab f32
    # temporary stays live across the variance reduction (review: lets TD/N
    # grow ~1.5x under the same VMEM limit).  mean*inv is a cheap [1, TD] row.
    # TODO(synk): if a v7x bundle dump shows the VALU slot binding, move the
    # column reductions onto the MXU via a ones-vector matmul.
    o_ref[...] = (x * inv - mean * inv).astype(o_ref.dtype)


def _resident_col_tile(n: int, d_pad: int, itemsize: int):
    """Column tile for the single-pass path, or None if N is too large for VMEM."""
    # Per-element VMEM cost: 2x double-buffered input DMA slabs + 2x output
    # slabs (input dtype) + ~3 f32-sized compute temporaries.
    per_elem = 4 * itemsize + 12
    max_elems = max(_USABLE_VMEM // per_elem, 0)
    max_td = max_elems // max(n, 1)
    td = min(_MAX_TD, d_pad, (max_td // _LANE) * _LANE)
    if td < _LANE:
        return None
    # Aim for >=4 column tiles (>=2 for small D) so both v7x TensorCores get
    # work and DMA/compute pipelining has steps to overlap.
    if d_pad >= 4 * _LANE:
        td = min(td, max(_LANE, (d_pad // 4) // _LANE * _LANE))
    elif d_pad >= 2 * _LANE:
        td = min(td, (d_pad // 2) // _LANE * _LANE)
    # Make td divide d_pad exactly: no OOB-padded garbage columns ever reach
    # the rsqrt, and the grid size is exact.
    return _largest_dividing_tile(d_pad, td)


def _pairnorm_resident(x, scale, eps, td):
    n, d_pad = x.shape
    kernel = functools.partial(
        _pairnorm_resident_kernel, scale=float(scale), eps=float(eps), inv_n=1.0 / n)
    return pl.pallas_call(
        kernel,
        out_shape=jax.ShapeDtypeStruct((n, d_pad), x.dtype),
        grid_spec=pltpu.PrefetchScalarGridSpec(
            num_scalar_prefetch=0,
            grid=(d_pad // td,),
            in_specs=[pl.BlockSpec((n, td), lambda j: (0, j))],
            out_specs=pl.BlockSpec((n, td), lambda j: (0, j)),
        ),
        compiler_params=pltpu.CompilerParams(
            dimension_semantics=("parallel",),
            vmem_limit_bytes=_VMEM_LIMIT_BYTES),
    )(x)


# ----------------------------------------------------------------------------
# Two-pass fallback: VMEM bounded independent of node count.
# Pass 1: per-column sum / sum-of-squares (f32 scratch) -> (mean, scale*rsqrt).
# Pass 2: normalize tile-by-tile.
# ----------------------------------------------------------------------------
def _stats_kernel(x_ref, stats_ref, sum_acc, sq_acc, *,
                  n_rows: int, row_tile: int, scale: float, eps: float,
                  need_mask: bool):
    i = pl.program_id(1)  # row-tile index (innermost, "arbitrary" axis)

    @pl.when(i == 0)
    def _():
        sum_acc[...] = jnp.zeros_like(sum_acc)
        sq_acc[...] = jnp.zeros_like(sq_acc)

    def _accumulate(xv):
        # Per-sublane partials: (tn, td) -> (tn//8, 8, td); reducing over the
        # leading axis is plain vreg-wise VPU adds.  The cross-sublane (XLU)
        # reduce happens once, in the finalize block below.
        xg = xv.reshape(row_tile // 8, 8, xv.shape[-1])
        sum_acc[...] += jnp.sum(xg, axis=0)
        sq_acc[...] += jnp.sum(xg * xg, axis=0)

    x = x_ref[...].astype(jnp.float32)                       # [TN, TD]
    if need_mask:
        # Only the final row tile is partial; mask only there (saves the iota +
        # compare + select on every other iteration).
        is_partial = i == pl.num_programs(1) - 1

        @pl.when(jnp.logical_not(is_partial))
        def _():
            _accumulate(x)

        @pl.when(is_partial)
        def _():
            rows = jax.lax.broadcasted_iota(jnp.int32, x.shape, 0) + i * row_tile
            _accumulate(jnp.where(rows < n_rows, x, 0.0))
    else:
        _accumulate(x)

    @pl.when(i == pl.num_programs(1) - 1)
    def _():
        inv_n = 1.0 / n_rows
        s = jnp.sum(sum_acc[...], axis=0, keepdims=True)     # (1, TD), XLU once
        sq = jnp.sum(sq_acc[...], axis=0, keepdims=True)
        mean = s * inv_n
        # E[x^2] - mean^2 (clamped): slightly less precise than the centered
        # form for large-mean columns; acceptable for the large-N fallback.
        var = jnp.maximum(sq * inv_n - mean * mean, 0.0)
        inv = scale * jax.lax.rsqrt(var + eps)
        stats_ref[0:1, :] = mean
        stats_ref[1:2, :] = inv


def _normalize_kernel(x_ref, stats_ref, o_ref):
    x = x_ref[...].astype(jnp.float32)
    mean = stats_ref[0:1, :]
    inv = stats_ref[1:2, :]
    o_ref[...] = (x * inv - mean * inv).astype(o_ref.dtype)


def _pairnorm_two_pass(x, scale, eps, td, tn):
    n, d_pad = x.shape
    grid_cols = d_pad // td
    grid_rows = pl.cdiv(n, tn)
    need_mask = (n % tn) != 0

    stats = pl.pallas_call(
        functools.partial(_stats_kernel, n_rows=n, row_tile=tn,
                          scale=float(scale), eps=float(eps), need_mask=need_mask),
        out_shape=jax.ShapeDtypeStruct((2, d_pad), jnp.float32),
        grid_spec=pltpu.PrefetchScalarGridSpec(
            num_scalar_prefetch=0,
            grid=(grid_cols, grid_rows),                      # reduction axis last
            in_specs=[pl.BlockSpec((tn, td), lambda j, i: (i, j))],
            out_specs=pl.BlockSpec((2, td), lambda j, i: (0, j)),
            scratch_shapes=[pltpu.VMEM((8, td), jnp.float32),
                            pltpu.VMEM((8, td), jnp.float32)]),
        compiler_params=pltpu.CompilerParams(
            dimension_semantics=("parallel", "arbitrary"),
            vmem_limit_bytes=_VMEM_LIMIT_BYTES),
    )(x)

    return pl.pallas_call(
        _normalize_kernel,
        out_shape=jax.ShapeDtypeStruct((n, d_pad), x.dtype),
        grid_spec=pltpu.PrefetchScalarGridSpec(
            num_scalar_prefetch=0,
            grid=(grid_rows, grid_cols),
            in_specs=[pl.BlockSpec((tn, td), lambda i, j: (i, j)),
                      pl.BlockSpec((2, td), lambda i, j: (0, j))],
            out_specs=pl.BlockSpec((tn, td), lambda i, j: (i, j)),
        ),
        compiler_params=pltpu.CompilerParams(
            dimension_semantics=("parallel", "parallel"),
            vmem_limit_bytes=_VMEM_LIMIT_BYTES),
    )(x, stats)


# ----------------------------------------------------------------------------
# Public entry point.
# ----------------------------------------------------------------------------
def pairnorm(x: jax.Array, scale: float = 1.0, eps: float = 1e-5, *,
             force_two_pass: bool = False, row_tile: int | None = None) -> jax.Array:
    """PairNorm forward. x: [N, D] (nodes x features)."""
    n, d = x.shape
    d_pad = _round_up(d, _LANE)
    # Pad D to a lane multiple so kernel stores are unmasked lane-dense vst;
    # padded zero columns normalize to 0 and are sliced off below.
    x_in = x if d_pad == d else jnp.pad(x, ((0, 0), (0, d_pad - d)))

    itemsize = x.dtype.itemsize
    td = None if force_two_pass else _resident_col_tile(n, d_pad, itemsize)

    if (td is not None and d_pad // td == 1
            and _VMEM_PHYS < 96 * 1024 * 1024 and n >= 8192):
        # v7x proxy (<=64 MiB VMEM per TC, 2 TCs): a single-tile resident grid
        # leaves one core idle and kills pipelining; with enough rows, prefer
        # the row-tiled two-pass path so both cores get work.
        td = None

    if td is not None:
        out = _pairnorm_resident(x_in, scale, eps, td)
    else:
        td2 = _largest_dividing_tile(d_pad, min(_MAX_TD, d_pad))
        if row_tile is None:
            tn = (_TWO_PASS_BLOCK_BYTES // (td2 * itemsize) // 8) * 8
            tn = max(8, min(2048, tn))
        else:
            tn = max(8, _round_up(row_tile, 8))
        tn = min(tn, _round_up(n, 8))
        out = _pairnorm_two_pass(x_in, scale, eps, td2, tn)

    return out if d_pad == d else out[:, :d]


def pairnorm_ref(x, scale=1.0, eps=1e-5):
    mean = jnp.mean(x, axis=0, keepdims=True)
    var = jnp.mean((x - mean) ** 2, axis=0, keepdims=True)
    return scale * (x - mean) / jnp.sqrt(var + eps)


if __name__ == "__main__":
    key = jax.random.PRNGKey(0)
    k1, k2, k3, k4 = jax.random.split(key, 4)

    # 1) Resident single-pass path: lane-aligned D, >=2 column tiles.
    x1 = jax.random.normal(k1, (64, 256), dtype=jnp.float32)
    o1 = jax.block_until_ready(pairnorm(x1, scale=1.0, eps=1e-5))
    r1 = pairnorm_ref(x1, 1.0, 1e-5)
    assert o1.shape == x1.shape and o1.dtype == x1.dtype
    assert jnp.allclose(o1, r1, atol=1e-5, rtol=1e-5), "mismatch (resident path)"

    # 2) Unaligned D -> wrapper pads to 128 and slices back; nontrivial scale.
    x2 = jax.random.normal(k2, (8, 32), dtype=jnp.float32)
    o2 = jax.block_until_ready(pairnorm(x2, scale=2.0, eps=1e-5))
    r2 = pairnorm_ref(x2, 2.0, 1e-5)
    assert o2.shape == x2.shape
    assert jnp.allclose(o2, r2, atol=1e-5, rtol=1e-5), "mismatch (padded D)"

    # 3) Two-pass fallback forced at a small size (partial row tile mask +
    #    scratch accumulation). Looser tolerance: uses E[x^2] - mean^2.
    x3 = jax.random.normal(k3, (200, 128), dtype=jnp.float32)
    o3 = jax.block_until_ready(
        pairnorm(x3, scale=1.0, eps=1e-5, force_two_pass=True, row_tile=64))
    r3 = pairnorm_ref(x3, 1.0, 1e-5)
    assert jnp.allclose(o3, r3, atol=1e-4, rtol=1e-4), "mismatch (two-pass path)"

    # 4) bf16 input: dtype-aware VMEM budget, f32 internal compute, bf16 out.
    x4 = jax.random.normal(k4, (32, 128), dtype=jnp.bfloat16)
    o4 = jax.block_until_ready(pairnorm(x4, scale=1.0, eps=1e-5))
    r4 = pairnorm_ref(x4.astype(jnp.float32), 1.0, 1e-5)
    assert o4.dtype == jnp.bfloat16
    assert jnp.allclose(o4.astype(jnp.float32), r4, atol=3e-2), "mismatch (bf16)"

    print("KERNEL_OK")
</pallas_src>

<mosaic_0001>
module attributes {stable_mosaic.version = 11 : i64} {
  func.func @_pairnorm_resident_kernel(%arg0: i32, %arg1: memref<64x128xf32, #tpu.memory_space<vmem>>, %arg2: memref<64x128xf32, #tpu.memory_space<vmem>>) attributes {dimension_semantics = [#tpu.dimension_semantics<parallel>], iteration_bounds = array<i64: 2>, scalar_prefetch = 0 : i64, scratch_operands = 0 : i64, tpu.core_type = #tpu.core_type<tc>, window_params = [{transform_indices = @transform_0, window_bounds = array<i64: 64, 128>}, {transform_indices = @transform_1, window_bounds = array<i64: 64, 128>}]} {
    %c0 = arith.constant 0 : index
    %c0_0 = arith.constant 0 : index
    %0 = vector.load %arg1[%c0, %c0_0] : memref<64x128xf32, #tpu.memory_space<vmem>>, vector<64x128xf32>
    %cst = arith.constant dense<0.000000e+00> : vector<128xf32>
    %1 = vector.multi_reduction <add>, %0, %cst [0] : vector<64x128xf32> to vector<128xf32>
    %2 = vector.shape_cast %1 : vector<128xf32> to vector<1x128xf32>
    %cst_1 = arith.constant 1.562500e-02 : f32
    %3 = vector.broadcast %cst_1 : f32 to vector<1x128xf32>
    %4 = arith.mulf %2, %3 : vector<1x128xf32>
    %5 = vector.broadcast %4 : vector<1x128xf32> to vector<64x128xf32>
    %6 = arith.subf %0, %5 : vector<64x128xf32>
    %7 = arith.mulf %6, %6 : vector<64x128xf32>
    %cst_2 = arith.constant dense<0.000000e+00> : vector<128xf32>
    %8 = vector.multi_reduction <add>, %7, %cst_2 [0] : vector<64x128xf32> to vector<128xf32>
    %9 = vector.shape_cast %8 : vector<128xf32> to vector<1x128xf32>
    %cst_3 = arith.constant 1.562500e-02 : f32
    %10 = vector.broadcast %cst_3 : f32 to vector<1x128xf32>
    %11 = arith.mulf %9, %10 : vector<1x128xf32>
    %cst_4 = arith.constant 9.99999974E-6 : f32
    %12 = vector.broadcast %cst_4 : f32 to vector<1x128xf32>
    %13 = arith.addf %11, %12 : vector<1x128xf32>
    %14 = math.rsqrt %13 : vector<1x128xf32>
    %cst_5 = arith.constant 1.000000e+00 : f32
    %15 = vector.broadcast %cst_5 : f32 to vector<1x128xf32>
    %16 = arith.mulf %15, %14 : vector<1x128xf32>
    %17 = vector.broadcast %16 : vector<1x128xf32> to vector<64x128xf32>
    %18 = arith.mulf %0, %17 : vector<64x128xf32>
    %19 = arith.mulf %4, %16 : vector<1x128xf32>
    %20 = vector.broadcast %19 : vector<1x128xf32> to vector<64x128xf32>
    %21 = arith.subf %18, %20 : vector<64x128xf32>
    %c0_6 = arith.constant 0 : index
    %c0_7 = arith.constant 0 : index
    %22 = vector.load %arg2[%c0_6, %c0_7] : memref<64x128xf32, #tpu.memory_space<vmem>>, vector<64x128xf32>
    tpu.vector_store %arg2[%c0_6, %c0_7], %21 {strides = array<i32>} : memref<64x128xf32, #tpu.memory_space<vmem>>, vector<64x128xf32>,
    return
  }
  func.func @transform_0(%arg0: i32) -> (i32, i32) {
    %c0_i32 = arith.constant 0 : i32
    %c0_i32_0 = arith.constant 0 : i32
    return %c0_i32, %arg0 : i32, i32
  }
  func.func @transform_1(%arg0: i32) -> (i32, i32) {
    %c0_i32 = arith.constant 0 : i32
    %c0_i32_0 = arith.constant 0 : i32
    return %c0_i32, %arg0 : i32, i32
  }
}

</mosaic_0001>

<llo_original>
// kernel: tpu_custom_call.1
$region0: #{tpu_custom_call.1}
  #allocation0 [shape = 'u32[]', space=smem, size = 0x4, offset = 0x4, fixed_abs, tag = 'smem constant byte address 0x4 - core index']
  #allocation1 [shape = 'u32[72,128]{1,0:T(1,128)}', space=vmem, size = 0x9000, scoped, tag = 'internal scratch']
  %s0 = inlined_call_operand.hbm [shape: f32[64,256], index: 0, kind: input, shape index: {}]
  %s1 = inlined_call_operand.hbm [shape: f32[64,256], index: 1, kind: output, shape index: {}]
  %s2 = sld [smem:[#allocation0]]
  $region41: #{tpu_custom_call.1} parent=0
    _
  %s4 = ssub.s32 1, %s2
  %s5 = scalar_select 0, %s4, %s2
  $region1: #{tpu_custom_call.1} parent=0
    #allocation2 [shape = 'u8[65536]{0}', space=vmem, size = 0x10000, scoped, tag = 'input window, operand 0']
    #allocation3 [shape = 's32[2]{0}', space=sflag, size = 0x8, scoped, tag = 'scoped memory for tpu_custom_call.1']
    #allocation4 [shape = 's32[2]{0}', space=sflag, size = 0x8, scoped, tag = 'scoped memory for tpu_custom_call.1']
    #allocation5 [shape = 'u8[65536]{0}', space=vmem, size = 0x10000, scoped, tag = 'output window, operand 0']
    %6 = vsyncpa [#allocation3], 0
    %s7 = scalar_lea.sflag [#allocation3], 1
    %8 = vsyncpa %s7, 0
    %9 = vsyncpa [#allocation4], 0
    %s10 = scalar_lea.sflag [#allocation4], 1
    %11 = vsyncpa %s10, 0
    loop: start=0, step=1, limit=4
    $region2: #{tpu_custom_call.1} parent=1 // loop_pre_header
      _
    $region3: #{tpu_custom_call.1} parent=1 // loop_header
      %s13 = sphi 0, %s17
      %p14 = scmp.ge.s32.totalorder %s13, 4
      %s23 = sphi 0, %s25
      %s26 = sphi 0, %s23
      %s27 = sphi 0, %s26
      %s43 = sphi 0, %s27
      %s49 = sphi 0, %s51
      %s52 = sphi 0, %s49
      %s53 = sphi 0, %s52
      %s69 = sphi 0, %s53
    $region4: #{tpu_custom_call.1} parent=1 // loop_header_branch
      %16 = sbr.rel (%p14) target = $region8
    $region5: #{tpu_custom_call.1} parent=1 // loop_body
      %s18 = ssub.s32 %s13, 1
      %s19 = ssub.s32 %s13, 2
      %s20 = sadd.s32 %s13, 1
      %s21 = ssub.s32 %s13, %s20
      %p22 = scmp.eq.s32.totalorder %s21, 0
      %s24 = sadd.s32 %s23, 1
      %s25 = scalar_select %p22, %s23, %s24
      %p28 = pneg %p22
      %p29 = scmp.eq.s32.totalorder %s13, 1
      %p30 = por %p28, %p29
      %p31 = scmp.ne.s32.totalorder %s23, %s26
      %p32 = scmp.eq.s32.totalorder %s13, 0
      %p33 = por %p31, %p32
      %p34 = scmp.ne.s32.totalorder %s23, %s26
      %p35 = scmp.eq.s32.totalorder %s18, 1
      %p36 = por %p34, %p35
      %p37 = scmp.ne.s32.totalorder %s26, %s27
      %p38 = scmp.eq.s32.totalorder %s18, 0
      %p39 = por %p37, %p38
      %p40 = scmp.ne.s32.totalorder %s26, %s27
      %p41 = scmp.eq.s32.totalorder %s19, 1
      %p42 = por %p40, %p41
      %p44 = scmp.ne.s32.totalorder %s27, %s43
      %p45 = scmp.eq.s32.totalorder %s19, 0
      %p46 = por %p44, %p45
      %s47 = ssub.s32 %s13, %s20
      %p48 = scmp.eq.s32.totalorder %s47, 0
      %s50 = sadd.s32 %s49, 1
      %s51 = scalar_select %p48, %s49, %s50
      %p54 = pneg %p48
      %p55 = scmp.eq.s32.totalorder %s13, 1
      %p56 = por %p54, %p55
      %p57 = scmp.ne.s32.totalorder %s49, %s52
      %p58 = scmp.eq.s32.totalorder %s13, 0
      %p59 = por %p57, %p58
      %p60 = scmp.ne.s32.totalorder %s49, %s52
      %p61 = scmp.eq.s32.totalorder %s18, 1
      %p62 = por %p60, %p61
      %p63 = scmp.ne.s32.totalorder %s52, %s53
      %p64 = scmp.eq.s32.totalorder %s18, 0
      %p65 = por %p63, %p64
      %p66 = scmp.ne.s32.totalorder %s52, %s53
      %p67 = scmp.eq.s32.totalorder %s19, 1
      %p68 = por %p66, %p67
      %p70 = scmp.ne.s32.totalorder %s53, %s69
      %p71 = scmp.eq.s32.totalorder %s19, 0
      %p72 = por %p70, %p71
      %p73 = scmp.le.s32.totalorder 1, %s13
      %p74 = scmp.lt.s32.totalorder %s13, 3
      %p75 = pnand %p73, %p74
      %p76 = pneg %p75
      // Predicated region
      $region9: #{tpu_custom_call.1} parent=5 // pred_check
        _
      $region10: #{tpu_custom_call.1} parent=5 // pred_check_branch
        %78 = sbr.rel (%p75) target = $region12
      $region11: #{tpu_custom_call.1} parent=5 // pred_region
        %s79 = ssub.s32 %s13, 1
      $region12: #{tpu_custom_call.1} parent=5 // pred_fallthru
        _
      %p80 = scmp.lt.s32.totalorder %s13, 2
      // Predicated region
      $region13: #{tpu_custom_call.1} parent=5 // pred_check
        %p81 = pneg %p80
      $region14: #{tpu_custom_call.1} parent=5 // pred_check_branch
        %83 = sbr.rel (%p81) target = $region16
      $region15: #{tpu_custom_call.1} parent=5 // pred_region
        // Predicated region
        $region17: #{tpu_custom_call.1} parent=15 // pred_check
          %p84 = pneg %p33
        $region18: #{tpu_custom_call.1} parent=15 // pred_check_branch
          %86 = sbr.rel (%p84) target = $region20
        $region19: #{tpu_custom_call.1} parent=15 // pred_region
          %s87 = sand.u32 %s23, 1
          %s88 = scalar_lea.sflag [#allocation3], %s87
          %s89 = sand.u32 %s23, 1
          %s90 = smul.addr %s89, 64
          %s91 = scalar_lea.vmem [#allocation2], %s90
          %93 = vsyncadd %s88, 0
          %s94 = smul.addr %s13, 8
          %s95 = scalar_lea.hbm %s0, %s94
          %s96 = sshll.u32 %s95, 4
          %s97 = int_to_ptr.hbm [resolvable:$true] %s96
          %s98 = sshll.u32 %s91, 4
          %s99 = int_to_ptr.vmem [resolvable:$true] %s98
          %104 = dma.hbm_to_vmem [thread:$0]  %s97, 1024, %s99, %s88, 256, 128, 8
        $region20: #{tpu_custom_call.1} parent=15 // pred_fallthru
          _
      $region16: #{tpu_custom_call.1} parent=5 // pred_fallthru
        _
      %p105 = scmp.le.s32.totalorder 1, %s13
      %p106 = scmp.lt.s32.totalorder %s13, 3
      %p107 = pnand %p105, %p106
      %p108 = pneg %p107
      // Predicated region
      $region21: #{tpu_custom_call.1} parent=5 // pred_check
        _
      $region22: #{tpu_custom_call.1} parent=5 // pred_check_branch
        %110 = sbr.rel (%p107) target = $region24
      $region23: #{tpu_custom_call.1} parent=5 // pred_region
        %s111 = ssub.s32 %s13, 1
        %s112 = sand.u32 %s26, 1
        %s113 = scalar_lea.sflag [#allocation3], %s112
        %s114 = sand.u32 %s26, 1
        %s115 = smul.addr %s114, 64
        %s116 = scalar_lea.vmem [#allocation2], %s115
        // Predicated region
        $region25: #{tpu_custom_call.1} parent=23 // pred_check
          %p117 = pneg %p39
        $region26: #{tpu_custom_call.1} parent=23 // pred_check_branch
          %119 = sbr.rel (%p117) target = $region28
        $region27: #{tpu_custom_call.1} parent=23 // pred_region
          %121 = dma.done %s113, 1024
        $region28: #{tpu_custom_call.1} parent=23 // pred_fallthru
          _
        %s122 = sand.u32 %s26, 1
        %s123 = scalar_lea.sflag [#allocation3], %s122
        %s124 = sand.u32 %s26, 1
        %s125 = smul.addr %s124, 64
        %s126 = scalar_lea.vmem [#allocation2], %s125
        %p127 = pneg %p39
        %p128 = pneg %p36
        %p129 = pneg %p65
        %p130 = pneg %p62
        %s131 = sand.u32 %s52, 1
        %s132 = scalar_lea.sflag [#allocation4], %s131
        %s133 = sand.u32 %s52, 1
        %s134 = smul.addr %s133, 64
        %s135 = scalar_lea.vmem [#allocation5], %s134
        %v136 = vld [vmem:[%s116] sm:$0xff]
        %v137 = vld [vmem:[%s116 + $0x8] sm:$0xff]
        %v138 = vld [vmem:[%s116 + $0x10] sm:$0xff]
        %v139 = vld [vmem:[%s116 + $0x18] sm:$0xff]
        %v140 = vld [vmem:[%s116 + $0x20] sm:$0xff]
        %v141 = vld [vmem:[%s116 + $0x28] sm:$0xff]
        %v142 = vld [vmem:[%s116 + $0x30] sm:$0xff]
        %v143 = vld [vmem:[%s116 + $0x38] sm:$0xff]
        %v144 = vadd.f32 %v136, %v137
        %v145 = vadd.f32 %v144, %v138
        %v146 = vadd.f32 %v145, %v139
        %v147 = vadd.f32 %v146, %v140
        %v148 = vadd.f32 %v147, %v141
        %v149 = vadd.f32 %v148, %v142
        %v150 = vadd.f32 %v149, %v143
        %v151 = vrot.slane %v150, 4
        %v152 = vadd.f32 %v150, %v151
        %v153 = vrot.slane %v152, 2
        %v154 = vadd.f32 %v152, %v153
        %v155 = vrot.slane %v154, 1
        %v156 = vadd.f32 %v154, %v155
        %v157 = vmul.f32 %v156, 0.015625
        %v158 = vsub.f32 %v136, %v157
        %v159 = vsub.f32 %v137, %v157
        %v160 = vsub.f32 %v138, %v157
        %v161 = vsub.f32 %v139, %v157
        %v162 = vsub.f32 %v140, %v157
        %v163 = vsub.f32 %v141, %v157
        %v164 = vsub.f32 %v142, %v157
        %v165 = vsub.f32 %v143, %v157
        %v166 = vmul.f32 %v158, %v158
        %v167 = vmul.f32 %v159, %v159
        %v168 = vmul.f32 %v160, %v160
        %v169 = vmul.f32 %v161, %v161
        %v170 = vmul.f32 %v162, %v162
        %v171 = vmul.f32 %v163, %v163
        %v172 = vmul.f32 %v164, %v164
        %v173 = vmul.f32 %v165, %v165
        %v174 = vadd.f32 %v166, %v167
        %v175 = vadd.f32 %v174, %v168
        %v176 = vadd.f32 %v175, %v169
        %v177 = vadd.f32 %v176, %v170
        %v178 = vadd.f32 %v177, %v171
        %v179 = vadd.f32 %v178, %v172
        %v180 = vadd.f32 %v179, %v173
        %v181 = vrot.slane %v180, 4
        %v182 = vadd.f32 %v180, %v181
        %v183 = vrot.slane %v182, 2
        %v184 = vadd.f32 %v182, %v183
        %v185 = vrot.slane %v184, 1
        %v186 = vadd.f32 %v184, %v185
        %v187 = vmul.f32 %v186, 0.015625
        %v188 = vadd.f32 %v187, 1e-05
        %v189 = vrsqrt.pop %v188
        %v190 = vmul.f32 %v189, %v188
        %v191 = vmul.f32 %v190, %v189
        %v192 = vmul.f32 0.5, %v191
        %v193 = vsub.f32 1.5, %v192
        %v194 = vmul.f32 %v189, %v193
        %vm195 = vweird.f32 %v188
        %vm196 = vweird.f32 %v189
        %vm197 = vmor %vm195, %vm196
        %v198 = vsel %vm197, %v189, %v194
        %v199 = vmul.f32 %v136, %v198
        %v200 = vmul.f32 %v137, %v198
        %v201 = vmul.f32 %v138, %v198
        %v202 = vmul.f32 %v139, %v198
        %v203 = vmul.f32 %v140, %v198
        %v204 = vmul.f32 %v141, %v198
        %v205 = vmul.f32 %v142, %v198
        %v206 = vmul.f32 %v143, %v198
        %v207 = vmul.f32 %v157, %v198
        %v208 = vsub.f32 %v199, %v207
        %v209 = vsub.f32 %v200, %v207
        %v210 = vsub.f32 %v201, %v207
        %v211 = vsub.f32 %v202, %v207
        %v212 = vsub.f32 %v203, %v207
        %v213 = vsub.f32 %v204, %v207
        %v214 = vsub.f32 %v205, %v207
        %v215 = vsub.f32 %v206, %v207
        %216 = vst [vmem:[%s135] sm:$0xff] %v208
        %217 = vst [vmem:[%s135 + $0x8] sm:$0xff] %v209
        %218 = vst [vmem:[%s135 + $0x10] sm:$0xff] %v210
        %219 = vst [vmem:[%s135 + $0x18] sm:$0xff] %v211
        %220 = vst [vmem:[%s135 + $0x20] sm:$0xff] %v212
        %221 = vst [vmem:[%s135 + $0x28] sm:$0xff] %v213
        %222 = vst [vmem:[%s135 + $0x30] sm:$0xff] %v214
        %223 = vst [vmem:[%s135 + $0x38] sm:$0xff] %v215
        %s224 = sand.u32 %s52, 1
        %s225 = scalar_lea.sflag [#allocation4], %s224
        %s226 = sand.u32 %s52, 1
        %s227 = smul.addr %s226, 64
        %s228 = scalar_lea.vmem [#allocation5], %s227
        // Predicated region
        $region29: #{tpu_custom_call.1} parent=23 // pred_check
          %p229 = pneg %p62
        $region30: #{tpu_custom_call.1} parent=23 // pred_check_branch
          %231 = sbr.rel (%p229) target = $region32
        $region31: #{tpu_custom_call.1} parent=23 // pred_region
          %233 = vsyncadd %s225, 0
          %s234 = smul.addr %s18, 8
          %s235 = scalar_lea.hbm %s1, %s234
          %s236 = sshll.u32 %s228, 4
          %s237 = int_to_ptr.vmem [resolvable:$true] %s236
          %s238 = sshll.u32 %s235, 4
          %s239 = int_to_ptr.hbm [resolvable:$true] %s238
          %244 = dma.vmem_to_hbm [thread:$0]  %s237, 1024, %s239, %s225, 128, 256, 8
        $region32: #{tpu_custom_call.1} parent=23 // pred_fallthru
          _
      $region24: #{tpu_custom_call.1} parent=5 // pred_fallthru
        _
      %p245 = scmp.le.s32.totalorder 2, %s13
      // Predicated region
      $region33: #{tpu_custom_call.1} parent=5 // pred_check
        %p246 = pneg %p245
      $region34: #{tpu_custom_call.1} parent=5 // pred_check_branch
        %248 = sbr.rel (%p246) target = $region36
      $region35: #{tpu_custom_call.1} parent=5 // pred_region
        %s249 = ssub.s32 %s13, 2
        // Predicated region
        $region37: #{tpu_custom_call.1} parent=35 // pred_check
          %p250 = pneg %p68
        $region38: #{tpu_custom_call.1} parent=35 // pred_check_branch
          %252 = sbr.rel (%p250) target = $region40
        $region39: #{tpu_custom_call.1} parent=35 // pred_region
          %s253 = sand.u32 %s53, 1
          %s254 = scalar_lea.sflag [#allocation4], %s253
          %s255 = sand.u32 %s53, 1
          %s256 = smul.addr %s255, 64
          %s257 = scalar_lea.vmem [#allocation5], %s256
          %259 = dma.done %s254, 1024
        $region40: #{tpu_custom_call.1} parent=35 // pred_fallthru
          _
      $region36: #{tpu_custom_call.1} parent=5 // pred_fallthru
        _
    $region6: #{tpu_custom_call.1} parent=1 // loop_footer
      %s17 = sadd.s32 1, %s13
    $region7: #{tpu_custom_call.1} parent=1 // loop_footer_branch
      %12 = sbr.rel target = $region3
    $region8: #{tpu_custom_call.1} parent=1 // loop_exit
      _
    %260 = vsyncpa [#allocation3], 1
    %s261 = scalar_lea.sflag [#allocation3], 1
    %262 = vsyncpa %s261, 1
    %263 = vsyncpa [#allocation4], 1
    %s264 = scalar_lea.sflag [#allocation4], 1
    %265 = vsyncpa %s264, 1

</llo_original>
